<compile_context>
chip_gen: v5e
topology: v5e:2x2
jax: 0.10.0
libtpu: 0.0.40
codegen_flags: <defaults>
</compile_context>

<pallas_src>
import functools

import jax
import jax.numpy as jnp
from jax.experimental import pallas as pl
from jax.experimental.pallas import tpu as pltpu


# ----------------------------------------------------------------------------
# Gradient Reversal Layer
#   forward : identity (no kernel, no copy)
#   backward: dx = -lambda * g
# ----------------------------------------------------------------------------
_SMALL_BYTES = 1 << 20   # below ~1 MiB skip the Pallas launch, let XLA fuse it
_LANES = 128
_TILE_ROWS = 512


def _neg_scale_kernel(g_ref, o_ref, *, neg_lam):
    # neg_lam is a trace-time Python float constant (no SMEM operand needed).
    o_ref[...] = g_ref[...] * neg_lam


def _pallas_neg_scale(g, lam):
    """-lam * g via a tiled, lane-dense (TR, 128) Pallas kernel."""
    shape, dtype = g.shape, g.dtype
    flat = g.reshape(-1, _LANES)            # lane-dense 2-D view
    rows = flat.shape[0]
    tr = rows if rows <= _TILE_ROWS else _TILE_ROWS   # full dim or multiple of 8
    out = pl.pallas_call(
        functools.partial(_neg_scale_kernel, neg_lam=-float(lam)),
        out_shape=jax.ShapeDtypeStruct(flat.shape, dtype),
        grid=(pl.cdiv(rows, tr),),
        in_specs=[pl.BlockSpec((tr, _LANES), lambda i: (i, 0))],
        out_specs=pl.BlockSpec((tr, _LANES), lambda i: (i, 0)),
        input_output_aliases={0: 0},        # g is dead afterwards; reuse its buffer
        compiler_params=pltpu.CompilerParams(
            dimension_semantics=("parallel",)),
    )(flat)
    return out.reshape(shape)


def _neg_scale(g, lam):
    # Tiny tensors: XLA's fused scalar multiply beats any kernel launch.
    if g.size * g.dtype.itemsize < _SMALL_BYTES or g.size % _LANES != 0:
        return (-float(lam)) * g
    return _pallas_neg_scale(g, lam)


@functools.partial(jax.custom_vjp, nondiff_argnums=(1,))
def gradient_reversal(x, lambda_reversal=1.0):
    return x                                 # forward is the identity


def _grl_fwd(x, lambda_reversal):
    return x, None


def _grl_bwd(lambda_reversal, _residuals, g):
    return (_neg_scale(g, lambda_reversal),)


gradient_reversal.defvjp(_grl_fwd, _grl_bwd)


class GradientReversal:
    """Forward = identity; backward multiplies upstream grads by -lambda."""

    def __init__(self, lambda_reversal=1):
        self.lambda_ = float(lambda_reversal)

    def __call__(self, x):
        return gradient_reversal(x, self.lambda_)


# ----------------------------------------------------------------------------
# Fused classifier MLP kernel:  relu(x@W1+b1) -> relu(.@W2+b2) -> .@W3+b3
# ----------------------------------------------------------------------------
def _mlp_kernel(x_ref, w1_ref, b1_ref, w2_ref, b2_ref, w3_ref, b3_ref, o_ref):
    h = jnp.dot(x_ref[...], w1_ref[...], preferred_element_type=jnp.float32)
    h = jnp.maximum(h + b1_ref[...], 0.0)
    h = jnp.dot(h.astype(w2_ref.dtype), w2_ref[...],
                preferred_element_type=jnp.float32)
    h = jnp.maximum(h + b2_ref[...], 0.0)
    out = jnp.dot(h.astype(w3_ref.dtype), w3_ref[...],
                  preferred_element_type=jnp.float32)
    out = out + b3_ref[...]
    o_ref[...] = out.astype(o_ref.dtype)


def speaker_classifier_forward(x, params, lambda_reversal=1.0, *, tile_m=256):
    """x: (B, L, embed_dim)  ->  (B, L, nb_speakers).

    nn.Linear acts on the last axis, so features live on the last dim.
    """
    x = gradient_reversal(x, lambda_reversal)

    B, L, E = x.shape
    S = params["w3"].shape[1]
    M = B * L
    x2d = x.reshape(M, E)

    tm = M if M <= tile_m else tile_m        # full extent or multiple of 8

    out2d = pl.pallas_call(
        _mlp_kernel,
        out_shape=jax.ShapeDtypeStruct((M, S), x.dtype),
        grid=(pl.cdiv(M, tm),),
        in_specs=[
            pl.BlockSpec((tm, E), lambda i: (i, 0)),   # activations, tiled rows
            pl.BlockSpec((E, E), lambda i: (0, 0)),    # W1 (resident)
            pl.BlockSpec((1, E), lambda i: (0, 0)),    # b1
            pl.BlockSpec((E, E), lambda i: (0, 0)),    # W2
            pl.BlockSpec((1, E), lambda i: (0, 0)),    # b2
            pl.BlockSpec((E, S), lambda i: (0, 0)),    # W3
            pl.BlockSpec((1, S), lambda i: (0, 0)),    # b3
        ],
        out_specs=pl.BlockSpec((tm, S), lambda i: (i, 0)),
        compiler_params=pltpu.CompilerParams(
            dimension_semantics=("parallel",)),        # shards rows across TCs (v7x)
    )(x2d, params["w1"], params["b1"], params["w2"], params["b2"],
      params["w3"], params["b3"])

    return out2d.reshape(B, L, S)


class SpeakerClassifier:
    """GradientReversal -> Linear(E,E) -> ReLU -> Linear(E,E) -> ReLU -> Linear(E,S)."""

    def __init__(self, embed_dim, nb_speakers, key, dtype=jnp.float32):
        k1, k2, k3 = jax.random.split(key, 3)

        def xavier_uniform(k, fan_in, fan_out, gain):
            limit = gain * (6.0 / (fan_in + fan_out)) ** 0.5
            return jax.random.uniform(k, (fan_in, fan_out), dtype, -limit, limit)

        relu_gain = 2.0 ** 0.5
        self.params = {
            "w1": xavier_uniform(k1, embed_dim, embed_dim, relu_gain),
            "b1": jnp.zeros((1, embed_dim), dtype),
            "w2": xavier_uniform(k2, embed_dim, embed_dim, relu_gain),
            "b2": jnp.zeros((1, embed_dim), dtype),
            "w3": xavier_uniform(k3, embed_dim, nb_speakers, 1.0),
            "b3": jnp.zeros((1, nb_speakers), dtype),
        }
        self.lambda_ = 1.0

    def __call__(self, x):
        return speaker_classifier_forward(x, self.params, self.lambda_)


# ----------------------------------------------------------------------------
# Demo
# ----------------------------------------------------------------------------
if __name__ == "__main__":
    key = jax.random.PRNGKey(0)
    kx, kp = jax.random.split(key)

    B, L, E, S = 2, 8, 32, 10                 # batch, seq, embed_dim, nb_speakers
    x = jax.random.normal(kx, (B, L, E), dtype=jnp.float32)

    model = SpeakerClassifier(E, S, kp)

    # --- fused Pallas forward vs pure-jnp reference -------------------------
    y = jax.block_until_ready(model(x))
    assert y.shape == (B, L, S) and y.dtype == x.dtype

    def ref_forward(inp):
        p = model.params
        h = jnp.maximum(inp @ p["w1"] + p["b1"], 0.0)
        h = jnp.maximum(h @ p["w2"] + p["b2"], 0.0)
        return h @ p["w3"] + p["b3"]

    assert jnp.allclose(y, ref_forward(x), atol=1e-5, rtol=1e-5), "MLP mismatch"

    # --- GradientReversal semantics: identity fwd, -lambda * g bwd ----------
    y_grl = gradient_reversal(x, 1.0)
    assert jnp.allclose(y_grl, x), "GRL forward must be identity"

    grl_grad = jax.grad(lambda inp: jnp.sum(gradient_reversal(inp, 1.0)))(x)
    grl_grad = jax.block_until_ready(grl_grad)
    assert jnp.allclose(grl_grad, -jnp.ones_like(x)), "GRL backward must reverse grads"

    # --- exercise the tiled Pallas backward-scale kernel directly -----------
    g = jnp.ones((B, L, E), jnp.float32)
    dx_pallas = jax.block_until_ready(_pallas_neg_scale(g, 1.0))
    assert jnp.allclose(dx_pallas, -g), "Pallas -lambda*g kernel mismatch"

    print("KERNEL_OK")
</pallas_src>

<mosaic_0001>
module attributes {stable_mosaic.version = 11 : i64} {
  func.func @_mlp_kernel(%arg0: i32, %arg1: memref<16x32xf32, #tpu.memory_space<vmem>>, %arg2: memref<32x32xf32, #tpu.memory_space<vmem>>, %arg3: memref<1x32xf32, #tpu.memory_space<vmem>>, %arg4: memref<32x32xf32, #tpu.memory_space<vmem>>, %arg5: memref<1x32xf32, #tpu.memory_space<vmem>>, %arg6: memref<32x10xf32, #tpu.memory_space<vmem>>, %arg7: memref<1x10xf32, #tpu.memory_space<vmem>>, %arg8: memref<16x10xf32, #tpu.memory_space<vmem>>) attributes {dimension_semantics = [#tpu.dimension_semantics<parallel>], iteration_bounds = array<i64: 1>, scalar_prefetch = 0 : i64, scratch_operands = 0 : i64, tpu.core_type = #tpu.core_type<tc>, window_params = [{transform_indices = @transform_0, window_bounds = array<i64: 16, 32>}, {pipeline_mode = #tpu.pipeline_mode<synchronous>, transform_indices = @transform_1, window_bounds = array<i64: 32, 32>}, {pipeline_mode = #tpu.pipeline_mode<synchronous>, transform_indices = @transform_2, window_bounds = array<i64: 1, 32>}, {pipeline_mode = #tpu.pipeline_mode<synchronous>, transform_indices = @transform_3, window_bounds = array<i64: 32, 32>}, {pipeline_mode = #tpu.pipeline_mode<synchronous>, transform_indices = @transform_4, window_bounds = array<i64: 1, 32>}, {pipeline_mode = #tpu.pipeline_mode<synchronous>, transform_indices = @transform_5, window_bounds = array<i64: 32, 10>}, {pipeline_mode = #tpu.pipeline_mode<synchronous>, transform_indices = @transform_6, window_bounds = array<i64: 1, 10>}, {transform_indices = @transform_7, window_bounds = array<i64: 16, 10>}]} {
    %c0 = arith.constant 0 : index
    %c0_0 = arith.constant 0 : index
    %0 = vector.load %arg1[%c0, %c0_0] : memref<16x32xf32, #tpu.memory_space<vmem>>, vector<16x32xf32>
    %c0_1 = arith.constant 0 : index
    %c0_2 = arith.constant 0 : index
    %1 = vector.load %arg2[%c0_1, %c0_2] : memref<32x32xf32, #tpu.memory_space<vmem>>, vector<32x32xf32>
    %cst = arith.constant dense<0.000000e+00> : vector<16x32xf32>
    %2 = tpu.matmul %0, %1, %cst {dimension_numbers = #tpu.dot_dimension_numbers<[1], [0], [0], [1], [0, 0, 1, 1], [], []>} : vector<16x32xf32>, vector<32x32xf32>, vector<16x32xf32> -> vector<16x32xf32>
    %c0_3 = arith.constant 0 : index
    %c0_4 = arith.constant 0 : index
    %3 = vector.load %arg3[%c0_3, %c0_4] : memref<1x32xf32, #tpu.memory_space<vmem>>, vector<1x32xf32>
    %4 = vector.broadcast %3 : vector<1x32xf32> to vector<16x32xf32>
    %5 = arith.addf %2, %4 : vector<16x32xf32>
    %cst_5 = arith.constant 0.000000e+00 : f32
    %6 = vector.broadcast %cst_5 : f32 to vector<16x32xf32>
    %7 = arith.maximumf %5, %6 : vector<16x32xf32>
    %c0_6 = arith.constant 0 : index
    %c0_7 = arith.constant 0 : index
    %8 = vector.load %arg4[%c0_6, %c0_7] : memref<32x32xf32, #tpu.memory_space<vmem>>, vector<32x32xf32>
    %cst_8 = arith.constant dense<0.000000e+00> : vector<16x32xf32>
    %9 = tpu.matmul %7, %8, %cst_8 {dimension_numbers = #tpu.dot_dimension_numbers<[1], [0], [0], [1], [0, 0, 1, 1], [], []>} : vector<16x32xf32>, vector<32x32xf32>, vector<16x32xf32> -> vector<16x32xf32>
    %c0_9 = arith.constant 0 : index
    %c0_10 = arith.constant 0 : index
    %10 = vector.load %arg5[%c0_9, %c0_10] : memref<1x32xf32, #tpu.memory_space<vmem>>, vector<1x32xf32>
    %11 = vector.broadcast %10 : vector<1x32xf32> to vector<16x32xf32>
    %12 = arith.addf %9, %11 : vector<16x32xf32>
    %cst_11 = arith.constant 0.000000e+00 : f32
    %13 = vector.broadcast %cst_11 : f32 to vector<16x32xf32>
    %14 = arith.maximumf %12, %13 : vector<16x32xf32>
    %c0_12 = arith.constant 0 : index
    %c0_13 = arith.constant 0 : index
    %15 = vector.load %arg6[%c0_12, %c0_13] : memref<32x10xf32, #tpu.memory_space<vmem>>, vector<32x10xf32>
    %cst_14 = arith.constant dense<0.000000e+00> : vector<16x10xf32>
    %16 = tpu.matmul %14, %15, %cst_14 {dimension_numbers = #tpu.dot_dimension_numbers<[1], [0], [0], [1], [0, 0, 1, 1], [], []>} : vector<16x32xf32>, vector<32x10xf32>, vector<16x10xf32> -> vector<16x10xf32>
    %c0_15 = arith.constant 0 : index
    %c0_16 = arith.constant 0 : index
    %17 = vector.load %arg7[%c0_15, %c0_16] : memref<1x10xf32, #tpu.memory_space<vmem>>, vector<1x10xf32>
    %18 = vector.broadcast %17 : vector<1x10xf32> to vector<16x10xf32>
    %19 = arith.addf %16, %18 : vector<16x10xf32>
    %c0_17 = arith.constant 0 : index
    %c0_18 = arith.constant 0 : index
    %20 = vector.load %arg8[%c0_17, %c0_18] : memref<16x10xf32, #tpu.memory_space<vmem>>, vector<16x10xf32>
    tpu.vector_store %arg8[%c0_17, %c0_18], %19 {strides = array<i32>} : memref<16x10xf32, #tpu.memory_space<vmem>>, vector<16x10xf32>,
    return
  }
  func.func @transform_0(%arg0: i32) -> (i32, i32) {
    %c0_i32 = arith.constant 0 : i32
    %c0_i32_0 = arith.constant 0 : i32
    return %arg0, %c0_i32 : i32, i32
  }
  func.func @transform_1(%arg0: i32) -> (i32, i32) {
    %c0_i32 = arith.constant 0 : i32
    %c0_i32_0 = arith.constant 0 : i32
    %c0_i32_1 = arith.constant 0 : i32
    return %c0_i32, %c0_i32_0 : i32, i32
  }
  func.func @transform_2(%arg0: i32) -> (i32, i32) {
    %c0_i32 = arith.constant 0 : i32
    %c0_i32_0 = arith.constant 0 : i32
    %c0_i32_1 = arith.constant 0 : i32
    return %c0_i32, %c0_i32_0 : i32, i32
  }
  func.func @transform_3(%arg0: i32) -> (i32, i32) {
    %c0_i32 = arith.constant 0 : i32
    %c0_i32_0 = arith.constant 0 : i32
    %c0_i32_1 = arith.constant 0 : i32
    return %c0_i32, %c0_i32_0 : i32, i32
  }
  func.func @transform_4(%arg0: i32) -> (i32, i32) {
    %c0_i32 = arith.constant 0 : i32
    %c0_i32_0 = arith.constant 0 : i32
    %c0_i32_1 = arith.constant 0 : i32
    return %c0_i32, %c0_i32_0 : i32, i32
  }
  func.func @transform_5(%arg0: i32) -> (i32, i32) {
    %c0_i32 = arith.constant 0 : i32
    %c0_i32_0 = arith.constant 0 : i32
    %c0_i32_1 = arith.constant 0 : i32
    return %c0_i32, %c0_i32_0 : i32, i32
  }
  func.func @transform_6(%arg0: i32) -> (i32, i32) {
    %c0_i32 = arith.constant 0 : i32
    %c0_i32_0 = arith.constant 0 : i32
    %c0_i32_1 = arith.constant 0 : i32
    return %c0_i32, %c0_i32_0 : i32, i32
  }
  func.func @transform_7(%arg0: i32) -> (i32, i32) {
    %c0_i32 = arith.constant 0 : i32
    %c0_i32_0 = arith.constant 0 : i32
    return %arg0, %c0_i32 : i32, i32
  }
}

</mosaic_0001>

<llo_original>
// kernel: tpu_custom_call.1
$region0: #{tpu_custom_call.1}
  #allocation0 [shape = 'u32[]', space=smem, size = 0x4, offset = 0x4, fixed_abs, tag = 'smem constant byte address 0x4 - core index']
  #allocation1 [shape = 'u32[72,128]{1,0:T(1,128)}', space=vmem, size = 0x9000, scoped, tag = 'internal scratch']
  %s0 = inlined_call_operand.vmem [shape: f32[16,32], index: 0, kind: input, shape index: {}]
  %s1 = inlined_call_operand.vmem [shape: f32[32,32], index: 1, kind: input, shape index: {}]
  %s2 = inlined_call_operand.vmem [shape: f32[1,32], index: 2, kind: input, shape index: {}]
  %s3 = inlined_call_operand.hbm [shape: f32[32,32], index: 3, kind: input, shape index: {}]
  %s4 = inlined_call_operand.vmem [shape: f32[1,32], index: 4, kind: input, shape index: {}]
  %s5 = inlined_call_operand.vmem [shape: f32[32,10], index: 5, kind: input, shape index: {}]
  %s6 = inlined_call_operand.vmem [shape: f32[1,10], index: 6, kind: input, shape index: {}]
  %s7 = inlined_call_operand.hbm [shape: f32[16,10], index: 7, kind: output, shape index: {}]
  %s8 = sld [smem:[#allocation0]]
  $region42: #{tpu_custom_call.1} parent=0
    _
  %s10 = ssub.s32 1, %s8
  %s11 = scalar_select 0, %s10, %s8
  $region1: #{tpu_custom_call.1} parent=0
    #allocation2 [shape = 'u8[16384]{0}', space=vmem, size = 0x4000, scoped, tag = 'input window, operand 3, single buffered']
    #allocation3 [shape = 's32[1]{0}', space=sflag, size = 0x4, scoped, tag = 'scoped memory for tpu_custom_call.1']
    #allocation4 [shape = 's32[1]{0}', space=sflag, size = 0x4, scoped, tag = 'scoped memory for tpu_custom_call.1']
    #allocation5 [shape = 'u8[8192]{0}', space=vmem, size = 0x2000, scoped, tag = 'output window, operand 0, single buffered']
    %12 = vsyncpa [#allocation3], 0
    %13 = vsyncpa [#allocation4], 0
    // Predicated region
    $region2: #{tpu_custom_call.1} parent=1 // pred_check
      _
    $region3: #{tpu_custom_call.1} parent=1 // pred_check_branch
      %15 = sbr.rel (0) target = $region5
    $region4: #{tpu_custom_call.1} parent=1 // pred_region
      _
    $region5: #{tpu_custom_call.1} parent=1 // pred_fallthru
      _
    // Predicated region
    $region6: #{tpu_custom_call.1} parent=1 // pred_check
      _
    $region7: #{tpu_custom_call.1} parent=1 // pred_check_branch
      %17 = sbr.rel (0) target = $region9
    $region8: #{tpu_custom_call.1} parent=1 // pred_region
      _
    $region9: #{tpu_custom_call.1} parent=1 // pred_fallthru
      _
    // Predicated region
    $region10: #{tpu_custom_call.1} parent=1 // pred_check
      _
    $region11: #{tpu_custom_call.1} parent=1 // pred_check_branch
      %19 = sbr.rel (0) target = $region13
    $region12: #{tpu_custom_call.1} parent=1 // pred_region
      _
    $region13: #{tpu_custom_call.1} parent=1 // pred_fallthru
      _
    // Predicated region
    $region14: #{tpu_custom_call.1} parent=1 // pred_check
      _
    $region15: #{tpu_custom_call.1} parent=1 // pred_check_branch
      %21 = sbr.rel (0) target = $region17
    $region16: #{tpu_custom_call.1} parent=1 // pred_region
      %23 = vsyncadd [#allocation3], 0
      %s24 = sshll.u32 %s3, 4
      %s25 = int_to_ptr.hbm [resolvable:$true] %s24
      %s26 = sshll.u32 [#allocation2], 4
      %s27 = int_to_ptr.vmem [resolvable:$true] %s26
      %32 = dma.hbm_to_vmem [thread:$0]  %s25, 512, %s27, [#allocation3], 128, 128, 8
    $region17: #{tpu_custom_call.1} parent=1 // pred_fallthru
      _
    // Predicated region
    $region18: #{tpu_custom_call.1} parent=1 // pred_check
      _
    $region19: #{tpu_custom_call.1} parent=1 // pred_check_branch
      %34 = sbr.rel (0) target = $region21
    $region20: #{tpu_custom_call.1} parent=1 // pred_region
      _
    $region21: #{tpu_custom_call.1} parent=1 // pred_fallthru
      _
    // Predicated region
    $region22: #{tpu_custom_call.1} parent=1 // pred_check
      _
    $region23: #{tpu_custom_call.1} parent=1 // pred_check_branch
      %36 = sbr.rel (0) target = $region25
    $region24: #{tpu_custom_call.1} parent=1 // pred_region
      _
    $region25: #{tpu_custom_call.1} parent=1 // pred_fallthru
      _
    // Predicated region
    $region26: #{tpu_custom_call.1} parent=1 // pred_check
      _
    $region27: #{tpu_custom_call.1} parent=1 // pred_check_branch
      %38 = sbr.rel (0) target = $region29
    $region28: #{tpu_custom_call.1} parent=1 // pred_region
      _
    $region29: #{tpu_custom_call.1} parent=1 // pred_fallthru
      _
    // Predicated region
    $region30: #{tpu_custom_call.1} parent=1 // pred_check
      _
    $region31: #{tpu_custom_call.1} parent=1 // pred_check_branch
      %40 = sbr.rel (0) target = $region33
    $region32: #{tpu_custom_call.1} parent=1 // pred_region
      %42 = dma.done [#allocation3], 512
    $region33: #{tpu_custom_call.1} parent=1 // pred_fallthru
      _
    %v43 = vld [vmem:[%s0] sm:$0xff]
    %v44 = vld [vmem:[%s0 + $0x8] sm:$0xff]
    %v45 = vld [vmem:[%s1] sm:$0xff]
    %v46 = vld [vmem:[%s1 + $0x8] sm:$0xff]
    %v47 = vld [vmem:[%s1 + $0x10] sm:$0xff]
    %v48 = vld [vmem:[%s1 + $0x18] sm:$0xff]
    %v49 = vld [vmem:[%s2] sm:$0x1]
    %v51 = vperm.slane %v49, 0
    %vm53 = vcmask 261120
    %v55 = vsel %vm53, %v43, 0
    %v58 = vsel %vm53, %v44, 0
    %60 = vmatpush.msra.mxu0 0.0
    %61 = vmatpush.msra.mxu0 0.0
    %62 = vmatpush.msra.mxu0 0.0
    %63 = vmatpush.msra.mxu0 0.0
    %64 = vmatpush.msra.mxu0 0.0
    %65 = vmatpush.msra.mxu0 0.0
    %66 = vmatpush.msra.mxu0 0.0
    %67 = vmatpush.msra.mxu0 0.0
    %68 = vmatpush.msra.mxu0 0.0
    %69 = vmatpush.msra.mxu0 0.0
    %70 = vmatpush.msra.mxu0 0.0
    %71 = vmatpush.msra.mxu0 0.0
    %72 = vmatpush.msra.mxu0 %v48
    %73 = vmatpush.msra.mxu0 %v47
    %74 = vmatpush.msra.mxu0 %v46
    %75 = vmatpush.msra.mxu0 %v45
    %76 = vmatmul.f32.gmra.mxu0 %v55
    %v77 = vpop.f32.mrf.mxu0
    %v78 = vadd.f32 %v51, %v77
    %79 = vmatmul.f32.gmra.mxu0 %v58
    %v80 = vpop.f32.mrf.mxu0
    %v81 = vadd.f32 %v51, %v80
    %82 = vdwg.mxu0
    %v83 = vmax.f32 %v78, 0.0
    %v84 = vmax.f32 %v81, 0.0
    %v85 = vld [vmem:[#allocation2] sm:$0xff]
    %v86 = vld [vmem:[#allocation2 + $0x8] sm:$0xff]
    %v87 = vld [vmem:[#allocation2 + $0x10] sm:$0xff]
    %v88 = vld [vmem:[#allocation2 + $0x18] sm:$0xff]
    %v89 = vld [vmem:[%s4] sm:$0x1]
    %v91 = vperm.slane %v89, 0
    %v94 = vsel %vm53, %v83, 0
    %v97 = vsel %vm53, %v84, 0
    %99 = vmatpush.msra.mxu0 0.0
    %100 = vmatpush.msra.mxu0 0.0
    %101 = vmatpush.msra.mxu0 0.0
    %102 = vmatpush.msra.mxu0 0.0
    %103 = vmatpush.msra.mxu0 0.0
    %104 = vmatpush.msra.mxu0 0.0
    %105 = vmatpush.msra.mxu0 0.0
    %106 = vmatpush.msra.mxu0 0.0
    %107 = vmatpush.msra.mxu0 0.0
    %108 = vmatpush.msra.mxu0 0.0
    %109 = vmatpush.msra.mxu0 0.0
    %110 = vmatpush.msra.mxu0 0.0
    %111 = vmatpush.msra.mxu0 %v88
    %112 = vmatpush.msra.mxu0 %v87
    %113 = vmatpush.msra.mxu0 %v86
    %114 = vmatpush.msra.mxu0 %v85
    %115 = vmatmul.f32.gmra.mxu0 %v94
    %v116 = vpop.f32.mrf.mxu0
    %v117 = vadd.f32 %v91, %v116
    %118 = vmatmul.f32.gmra.mxu0 %v97
    %v119 = vpop.f32.mrf.mxu0
    %v120 = vadd.f32 %v91, %v119
    %121 = vdwg.mxu0
    %v122 = vmax.f32 %v117, 0.0
    %v123 = vmax.f32 %v120, 0.0
    %v124 = vld [vmem:[%s5] sm:$0xff]
    %v125 = vld [vmem:[%s5 + $0x8] sm:$0xff]
    %v126 = vld [vmem:[%s5 + $0x10] sm:$0xff]
    %v127 = vld [vmem:[%s5 + $0x18] sm:$0xff]
    %v128 = vld [vmem:[%s6] sm:$0x1]
    %v130 = vperm.slane %v128, 0
    %v133 = vsel %vm53, %v122, 0
    %v136 = vsel %vm53, %v123, 0
    %138 = vmatpush.msra.mxu0 0.0
    %139 = vmatpush.msra.mxu0 0.0
    %140 = vmatpush.msra.mxu0 0.0
    %141 = vmatpush.msra.mxu0 0.0
    %142 = vmatpush.msra.mxu0 0.0
    %143 = vmatpush.msra.mxu0 0.0
    %144 = vmatpush.msra.mxu0 0.0
    %145 = vmatpush.msra.mxu0 0.0
    %146 = vmatpush.msra.mxu0 0.0
    %147 = vmatpush.msra.mxu0 0.0
    %148 = vmatpush.msra.mxu0 0.0
    %149 = vmatpush.msra.mxu0 0.0
    %150 = vmatpush.msra.mxu0 %v127
    %151 = vmatpush.msra.mxu0 %v126
    %152 = vmatpush.msra.mxu0 %v125
    %153 = vmatpush.msra.mxu0 %v124
    %154 = vmatmul.f32.gmra.mxu0 %v133
    %v155 = vpop.f32.mrf.mxu0
    %v156 = vadd.f32 %v130, %v155
    %157 = vmatmul.f32.gmra.mxu0 %v136
    %v158 = vpop.f32.mrf.mxu0
    %v159 = vadd.f32 %v130, %v158
    %160 = vdwg.mxu0
    %vm161 = vcmask 80896
    %162 = vst.msk [vmem:[#allocation5] sm:$0xff] %vm161, %v156
    %163 = vst.msk [vmem:[#allocation5 + $0x8] sm:$0xff] %vm161, %v159
    // Predicated region
    $region34: #{tpu_custom_call.1} parent=1 // pred_check
      _
    $region35: #{tpu_custom_call.1} parent=1 // pred_check_branch
      %165 = sbr.rel (0) target = $region37
    $region36: #{tpu_custom_call.1} parent=1 // pred_region
      %167 = vsyncadd [#allocation4], 0
      %s168 = sshll.u32 [#allocation5], 4
      %s169 = int_to_ptr.vmem [resolvable:$true] %s168
      %s170 = sshll.u32 %s7, 4
      %s171 = int_to_ptr.hbm [resolvable:$true] %s170
      %176 = dma.vmem_to_hbm [thread:$0]  %s169, 256, %s171, [#allocation4], 128, 128, 8
    $region37: #{tpu_custom_call.1} parent=1 // pred_fallthru
      _
    // Predicated region
    $region38: #{tpu_custom_call.1} parent=1 // pred_check
      _
    $region39: #{tpu_custom_call.1} parent=1 // pred_check_branch
      %178 = sbr.rel (0) target = $region41
    $region40: #{tpu_custom_call.1} parent=1 // pred_region
      %180 = dma.done [#allocation4], 256
    $region41: #{tpu_custom_call.1} parent=1 // pred_fallthru
      _
    %181 = vsyncpa [#allocation3], 1
    %182 = vsyncpa [#allocation4], 1

</llo_original>
